<compile_context>
chip_gen: v6e
topology: v6e:2x2x1
jax: 0.10.0
libtpu: 0.0.40
codegen_flags: <defaults>
</compile_context>

<pallas_src>
import jax
import jax.numpy as jnp
from jax.experimental import pallas as pl
from jax.experimental.pallas import tpu as pltpu

_MIN_TILE_BYTES = 1 << 20       # never shrink blocks below 1 MiB per array
_TARGET_TILE_BYTES = 4 << 20    # aim for ~4 MiB blocks (amortizes grid-step cost)
_LANE_CANDIDATES = (512, 1024, 256, 128)   # lane-dense widths (multiples of 128)


def _vmem_budget_bytes():
    """Per-call VMEM budget, derived from the actual chip generation."""
    try:
        cap = pltpu.get_tpu_info().vmem_capacity_bytes
    except Exception:
        cap = 64 << 20  # conservative (v7x-sized) fallback
    # Leave headroom: v5e/v6e (128 MiB physical) -> 64 MiB, v7x (64 MiB) -> 48 MiB.
    return min(cap * 3 // 4, 64 << 20)


def _multiply_kernel(*refs):
    """refs = (*in_refs, out_ref). out = prod(in_refs) elementwise (VPU)."""
    in_refs = refs[:-1]
    out_ref = refs[-1]
    acc = in_refs[0][...]          # seed from first input (no jnp.ones needed)
    for r in in_refs[1:]:
        acc = acc * r[...]
    out_ref[...] = acc


def _product_call(slabs, tile_rows, vmem_limit, alias_first):
    """One pipelined pallas_call over same-shaped (rows, lanes) slabs."""
    rows, lanes = slabs[0].shape
    n = len(slabs)
    dtype = slabs[0].dtype
    itemsize = jnp.dtype(dtype).itemsize

    grid0 = pl.cdiv(rows, tile_rows)
    if grid0 == 1:
        # Single step: use a full-array block (legal even if rows is not a
        # sublane multiple, since block dims equal the array dims).
        tile_rows = rows
    block = pl.BlockSpec((tile_rows, lanes), lambda i: (i, 0))

    cost = pl.CostEstimate(
        flops=max(n - 1, 0) * rows * lanes,
        transcendentals=0,
        bytes_accessed=(n + 1) * rows * lanes * itemsize,
    )
    kwargs = {}
    if alias_first:
        # Reuse the partial-product slab's HBM buffer as this call's output.
        kwargs["input_output_aliases"] = {0: 0}

    return pl.pallas_call(
        _multiply_kernel,
        out_shape=jax.ShapeDtypeStruct((rows, lanes), dtype),
        grid_spec=pl.GridSpec(
            grid=(grid0,),
            in_specs=[block] * n,
            out_specs=block,
        ),
        compiler_params=pltpu.CompilerParams(
            dimension_semantics=("parallel",),
            vmem_limit_bytes=vmem_limit,
        ),
        cost_estimate=cost,
        **kwargs,
    )(*slabs)


def multiply(inp_list):
    """Elementwise product of a list of same-shaped arrays via Pallas kernels."""
    assert len(inp_list) >= 1
    shape = inp_list[0].shape
    dtype = inp_list[0].dtype
    for x in inp_list:
        assert x.shape == shape and x.dtype == dtype

    n_elems = 1
    for d in shape:
        n_elems *= d
    itemsize = jnp.dtype(dtype).itemsize
    sublane = max(8, 32 // itemsize)   # 8 (f32/i32), 16 (bf16/f16), 32 (i8/fp8)

    # ---- lane-dense layout: zero-copy reshape whenever possible -------------
    lanes = None
    for cand in _LANE_CANDIDATES:
        if n_elems % cand == 0:
            lanes = cand
            break
    pad = 0
    if lanes is None:
        # Ragged size (not a multiple of 128): pad the flattened arrays.
        # TODO(synk): replace with aligned-bulk main call + tiny tail call to
        # avoid the whole-array copy for ragged sizes.
        lanes = 128
        padded = pl.cdiv(n_elems, lanes) * lanes
        pad = padded - n_elems
    rows = (n_elems + pad) // lanes

    def to_slab(x):
        flat = x.reshape(-1)
        if pad:
            flat = jnp.pad(flat, (0, pad), constant_values=1)
        return flat.reshape(rows, lanes)

    slabs = [to_slab(x) for x in inp_list]

    # ---- VMEM budget -> operands per call & tile size ------------------------
    budget = _vmem_budget_bytes()
    row_bytes = lanes * itemsize
    # Fold as many inputs as possible into one call while keeping each
    # double-buffered block >= _MIN_TILE_BYTES: (n+1) * 2 * tile <= budget.
    max_inputs_per_call = max(2, budget // (2 * _MIN_TILE_BYTES) - 1)

    def run_call(call_inputs, alias_first):
        n_call = len(call_inputs)
        tile_bytes = min(_TARGET_TILE_BYTES, budget // (2 * (n_call + 1)))
        tile_bytes = max(tile_bytes, sublane * row_bytes)
        tile_rows = max(sublane, (tile_bytes // row_bytes) // sublane * sublane)
        # Ensure >= 2 grid steps when there is enough data, so v7x's two
        # TensorCores both get work on the "parallel" axis.
        if rows > 2 * sublane:
            half_rows = pl.cdiv(pl.cdiv(rows, 2), sublane) * sublane
            tile_rows = min(tile_rows, half_rows)
        return _product_call(call_inputs, tile_rows, budget, alias_first)

    partial = None
    idx = 0
    while idx < len(slabs):
        take = max_inputs_per_call - (0 if partial is None else 1)
        group = slabs[idx:idx + take]
        idx += take
        if partial is None:
            partial = run_call(group, alias_first=False)
        else:
            partial = run_call([partial] + group, alias_first=True)

    out_flat = partial.reshape(-1)
    if pad:
        out_flat = out_flat[:n_elems]
    return out_flat.reshape(shape)


if __name__ == "__main__":
    key = jax.random.PRNGKey(0)
    k0, k1, k2 = jax.random.split(key, 3)
    shape = (2, 4, 16, 16)  # small NCHW-style example
    x0 = jax.random.normal(k0, shape, dtype=jnp.float32)
    x1 = jax.random.normal(k1, shape, dtype=jnp.float32)
    x2 = jax.random.normal(k2, shape, dtype=jnp.float32)
    inp_list = [x0, x1, x2]

    result = multiply(inp_list)
    jax.block_until_ready(result)

    # Reference check (pure JAX, mirrors the PyTorch forward).
    ref = jnp.ones(shape, dtype=jnp.float32)
    for x in inp_list:
        ref = ref * x
    assert result.shape == shape and result.dtype == jnp.float32
    assert jnp.allclose(result, ref, atol=1e-6, rtol=1e-6)

    print("KERNEL_OK")
</pallas_src>

<mosaic_0001>
module attributes {stable_mosaic.version = 11 : i64} {
  func.func @_multiply_kernel(%arg0: i32, %arg1: memref<4x512xf32, #tpu.memory_space<vmem>>, %arg2: memref<4x512xf32, #tpu.memory_space<vmem>>, %arg3: memref<4x512xf32, #tpu.memory_space<vmem>>, %arg4: memref<4x512xf32, #tpu.memory_space<vmem>>) attributes {dimension_semantics = [#tpu.dimension_semantics<parallel>], iteration_bounds = array<i64: 1>, scalar_prefetch = 0 : i64, scratch_operands = 0 : i64, tpu.core_type = #tpu.core_type<tc>, window_params = [{transform_indices = @transform_0, window_bounds = array<i64: 4, 512>}, {transform_indices = @transform_1, window_bounds = array<i64: 4, 512>}, {transform_indices = @transform_2, window_bounds = array<i64: 4, 512>}, {transform_indices = @transform_3, window_bounds = array<i64: 4, 512>}]} {
    %c0 = arith.constant 0 : index
    %c0_0 = arith.constant 0 : index
    %0 = vector.load %arg1[%c0, %c0_0] : memref<4x512xf32, #tpu.memory_space<vmem>>, vector<4x512xf32>
    %c0_1 = arith.constant 0 : index
    %c0_2 = arith.constant 0 : index
    %1 = vector.load %arg2[%c0_1, %c0_2] : memref<4x512xf32, #tpu.memory_space<vmem>>, vector<4x512xf32>
    %2 = arith.mulf %0, %1 : vector<4x512xf32>
    %c0_3 = arith.constant 0 : index
    %c0_4 = arith.constant 0 : index
    %3 = vector.load %arg3[%c0_3, %c0_4] : memref<4x512xf32, #tpu.memory_space<vmem>>, vector<4x512xf32>
    %4 = arith.mulf %2, %3 : vector<4x512xf32>
    %c0_5 = arith.constant 0 : index
    %c0_6 = arith.constant 0 : index
    %5 = vector.load %arg4[%c0_5, %c0_6] : memref<4x512xf32, #tpu.memory_space<vmem>>, vector<4x512xf32>
    tpu.vector_store %arg4[%c0_5, %c0_6], %4 {strides = array<i32>} : memref<4x512xf32, #tpu.memory_space<vmem>>, vector<4x512xf32>,
    return
  }
  func.func @transform_0(%arg0: i32) -> (i32, i32) {
    %c0_i32 = arith.constant 0 : i32
    %c0_i32_0 = arith.constant 0 : i32
    return %arg0, %c0_i32 : i32, i32
  }
  func.func @transform_1(%arg0: i32) -> (i32, i32) {
    %c0_i32 = arith.constant 0 : i32
    %c0_i32_0 = arith.constant 0 : i32
    return %arg0, %c0_i32 : i32, i32
  }
  func.func @transform_2(%arg0: i32) -> (i32, i32) {
    %c0_i32 = arith.constant 0 : i32
    %c0_i32_0 = arith.constant 0 : i32
    return %arg0, %c0_i32 : i32, i32
  }
  func.func @transform_3(%arg0: i32) -> (i32, i32) {
    %c0_i32 = arith.constant 0 : i32
    %c0_i32_0 = arith.constant 0 : i32
    return %arg0, %c0_i32 : i32, i32
  }
}

</mosaic_0001>

<llo_original>
// kernel: tpu_custom_call.1
$region0: #{tpu_custom_call.1}
  #allocation0 [shape = 'u32[]', space=smem, size = 0x4, offset = 0x4, fixed_abs, tag = 'smem constant byte address 0x4 - core index']
  #allocation1 [shape = 'u32[144,128]{1,0:T(1,128)}', space=vmem, size = 0x12000, scoped, tag = 'internal scratch']
  %s0 = inlined_call_operand.hbm [shape: f32[4,512], index: 0, kind: input, shape index: {}]
  %s1 = inlined_call_operand.hbm [shape: f32[4,512], index: 1, kind: input, shape index: {}]
  %s2 = inlined_call_operand.hbm [shape: f32[4,512], index: 2, kind: input, shape index: {}]
  %s3 = inlined_call_operand.hbm [shape: f32[4,512], index: 3, kind: output, shape index: {}]
  %s4 = sld [smem:[#allocation0]]
  $region34: #{tpu_custom_call.1} parent=0
    _
  %s6 = ssub.s32 1, %s4
  %s7 = scalar_select 0, %s6, %s4
  $region1: #{tpu_custom_call.1} parent=0
    #allocation2 [shape = 'u8[8192]{0}', space=vmem, size = 0x2000, scoped, tag = 'input window, operand 0, single buffered']
    #allocation3 [shape = 's32[1]{0}', space=sflag, size = 0x4, scoped, tag = 'scoped memory for tpu_custom_call.1']
    #allocation4 [shape = 's32[1]{0}', space=sflag, size = 0x4, scoped, tag = 'scoped memory for tpu_custom_call.1']
    #allocation5 [shape = 'u8[8192]{0}', space=vmem, size = 0x2000, scoped, tag = 'input window, operand 1, single buffered']
    #allocation6 [shape = 's32[1]{0}', space=sflag, size = 0x4, scoped, tag = 'scoped memory for tpu_custom_call.1']
    #allocation7 [shape = 'u8[8192]{0}', space=vmem, size = 0x2000, scoped, tag = 'input window, operand 2, single buffered']
    #allocation8 [shape = 'u8[8192]{0}', space=vmem, size = 0x2000, scoped, tag = 'output window, operand 0, single buffered']
    %8 = vsyncpa [#allocation3], 0
    %9 = vsyncpa [#allocation6], 0
    %10 = vsyncpa [#allocation4], 0
    // Predicated region
    $region2: #{tpu_custom_call.1} parent=1 // pred_check
      _
    $region3: #{tpu_custom_call.1} parent=1 // pred_check_branch
      %12 = sbr.rel (0) target = $region5
    $region4: #{tpu_custom_call.1} parent=1 // pred_region
      %s14 = ssub.s32 256, 256
      %15 = vsyncadd [#allocation3], %s14
      %s17 = sshll.u32 [#allocation2], 4
      %s18 = int_to_ptr.vmem [resolvable:$true] %s17
      %20 = dma.hbm_to_vmem [thread:$0]  %s0, 256, %s18, [#allocation3]
    $region5: #{tpu_custom_call.1} parent=1 // pred_fallthru
      _
    // Predicated region
    $region6: #{tpu_custom_call.1} parent=1 // pred_check
      _
    $region7: #{tpu_custom_call.1} parent=1 // pred_check_branch
      %22 = sbr.rel (0) target = $region9
    $region8: #{tpu_custom_call.1} parent=1 // pred_region
      %s24 = ssub.s32 256, 256
      %25 = vsyncadd [#allocation6], %s24
      %s27 = sshll.u32 [#allocation5], 4
      %s28 = int_to_ptr.vmem [resolvable:$true] %s27
      %30 = dma.hbm_to_vmem [thread:$0]  %s1, 256, %s28, [#allocation6]
    $region9: #{tpu_custom_call.1} parent=1 // pred_fallthru
      _
    // Predicated region
    $region10: #{tpu_custom_call.1} parent=1 // pred_check
      _
    $region11: #{tpu_custom_call.1} parent=1 // pred_check_branch
      %32 = sbr.rel (0) target = $region13
    $region12: #{tpu_custom_call.1} parent=1 // pred_region
      %s34 = ssub.s32 256, 256
      %35 = vsyncadd [#allocation6], %s34
      %s37 = sshll.u32 [#allocation7], 4
      %s38 = int_to_ptr.vmem [resolvable:$true] %s37
      %40 = dma.hbm_to_vmem [thread:$0]  %s2, 256, %s38, [#allocation6]
    $region13: #{tpu_custom_call.1} parent=1 // pred_fallthru
      _
    // Predicated region
    $region14: #{tpu_custom_call.1} parent=1 // pred_check
      _
    $region15: #{tpu_custom_call.1} parent=1 // pred_check_branch
      %42 = sbr.rel (0) target = $region17
    $region16: #{tpu_custom_call.1} parent=1 // pred_region
      %43 = dma.done [#allocation3], 256
    $region17: #{tpu_custom_call.1} parent=1 // pred_fallthru
      _
    // Predicated region
    $region18: #{tpu_custom_call.1} parent=1 // pred_check
      _
    $region19: #{tpu_custom_call.1} parent=1 // pred_check_branch
      %45 = sbr.rel (0) target = $region21
    $region20: #{tpu_custom_call.1} parent=1 // pred_region
      %46 = dma.done [#allocation6], 256
    $region21: #{tpu_custom_call.1} parent=1 // pred_fallthru
      _
    // Predicated region
    $region22: #{tpu_custom_call.1} parent=1 // pred_check
      _
    $region23: #{tpu_custom_call.1} parent=1 // pred_check_branch
      %48 = sbr.rel (0) target = $region25
    $region24: #{tpu_custom_call.1} parent=1 // pred_region
      %49 = dma.done [#allocation6], 256
    $region25: #{tpu_custom_call.1} parent=1 // pred_fallthru
      _
    %v50 = vld [vmem:[#allocation2] sm:$0xff]
    %v51 = vld [vmem:[#allocation2 + $0x8] sm:$0xff]
    %v52 = vld [vmem:[#allocation5] sm:$0xff]
    %v53 = vld [vmem:[#allocation5 + $0x8] sm:$0xff]
    %v54 = vmul.f32 %v50, %v52
    %v55 = vmul.f32 %v51, %v53
    %v56 = vld [vmem:[#allocation7] sm:$0xff]
    %v57 = vld [vmem:[#allocation7 + $0x8] sm:$0xff]
    %v58 = vmul.f32 %v54, %v56
    %v59 = vmul.f32 %v55, %v57
    %60 = vst [vmem:[#allocation8] sm:$0xff] %v58
    %61 = vst [vmem:[#allocation8 + $0x8] sm:$0xff] %v59
    // Predicated region
    $region26: #{tpu_custom_call.1} parent=1 // pred_check
      _
    $region27: #{tpu_custom_call.1} parent=1 // pred_check_branch
      %63 = sbr.rel (0) target = $region29
    $region28: #{tpu_custom_call.1} parent=1 // pred_region
      %s65 = ssub.s32 256, 256
      %66 = vsyncadd [#allocation4], %s65
      %s68 = sshll.u32 [#allocation8], 4
      %s69 = int_to_ptr.vmem [resolvable:$true] %s68
      %71 = dma.vmem_to_hbm [thread:$0]  %s69, 256, %s3, [#allocation4]
    $region29: #{tpu_custom_call.1} parent=1 // pred_fallthru
      _
    // Predicated region
    $region30: #{tpu_custom_call.1} parent=1 // pred_check
      _
    $region31: #{tpu_custom_call.1} parent=1 // pred_check_branch
      %73 = sbr.rel (0) target = $region33
    $region32: #{tpu_custom_call.1} parent=1 // pred_region
      %74 = dma.done [#allocation4], 256
    $region33: #{tpu_custom_call.1} parent=1 // pred_fallthru
      _
    %75 = vsyncpa [#allocation3], 1
    %76 = vsyncpa [#allocation6], 1
    %77 = vsyncpa [#allocation4], 1

</llo_original>
